<compile_context>
chip_gen: v7x
topology: tpu7x:2x2x1
jax: 0.10.0
libtpu: 0.0.40
codegen_flags: <defaults>
</compile_context>

<pallas_src>
import functools

import jax
import jax.numpy as jnp
from jax.experimental import pallas as pl
from jax.experimental.pallas import tpu as pltpu

_ACT_VOCAB, _DIST_VOCAB, _STEP_VOCAB = 7, 41, 15
_FUSED_VOCAB = 64  # 7 + 41 + 15 = 63, padded to 64


def _actseq_embedding_kernel(eps, ids_ref, tab_ref, gamma_ref, beta_ref, out_ref):
    """Fused 3-way embedding gather + sum + LayerNorm in lane-dense (H, TN) layout."""
    ids = ids_ref[...]                               # (3, TN) int32, pre-offset
    tn = ids.shape[-1]
    v = tab_ref.shape[-1]                            # fused vocab (64)

    # One combined one-hot over the fused vocab.  The three index ranges are
    # disjoint (offsets 0 / 7 / 48), so OR-ing the three per-stream one-hots and
    # doing a single matmul yields the SUM of the three embedding lookups.
    iota = jax.lax.broadcasted_iota(jnp.int32, (v, tn), 0)
    onehot = ((iota == ids[0:1, :])
              | (iota == ids[1:2, :])
              | (iota == ids[2:3, :])).astype(jnp.float32)   # (V, TN)

    # (H, V) @ (V, TN) -> (H, TN); TN is the lane (fast) axis everywhere.
    emb = jnp.dot(tab_ref[...].astype(jnp.float32), onehot,
                  preferred_element_type=jnp.float32)

    # LayerNorm over the hidden (sublane) axis.
    mean = jnp.mean(emb, axis=0, keepdims=True)
    centered = emb - mean
    var = jnp.mean(centered * centered, axis=0, keepdims=True)
    norm = centered * jax.lax.rsqrt(var + eps)
    out_ref[...] = norm * gamma_ref[...] + beta_ref[...]     # gamma/beta are (H, 1)


def actseq_embedding(act_seq, act_dist, act_step,
                     act_table, dist_table, step_table,
                     ln_gamma, ln_beta, *, eps=1e-12, tile_tokens=512):
    """act_seq/act_dist/act_step: (B, S) integer index arrays.

    Returns (B, S, H) float32: LayerNorm(act_emb + dist_emb + step_emb).
    """
    B, S = act_seq.shape
    H = act_table.shape[-1]
    N = B * S

    # ---- wrapper-side layout plumbing (cheap, done once) -------------------
    # Fused table rows: [0:7]=action, [7:48]=distance, [48:63]=step, row 63 = 0.
    fused = jnp.zeros((_FUSED_VOCAB, H), dtype=act_table.dtype)
    fused = fused.at[:_ACT_VOCAB].set(act_table)
    fused = fused.at[_ACT_VOCAB:_ACT_VOCAB + _DIST_VOCAB].set(dist_table)
    fused = fused.at[_ACT_VOCAB + _DIST_VOCAB:
                     _ACT_VOCAB + _DIST_VOCAB + _STEP_VOCAB].set(step_table)
    fused_t = fused.T                                 # (H, 64): lane axis = fused vocab

    # Pre-offset indices packed into one lane-dense (3, N) buffer.
    ids = jnp.stack(
        [act_seq.reshape(N).astype(jnp.int32),
         act_dist.reshape(N).astype(jnp.int32) + _ACT_VOCAB,
         act_step.reshape(N).astype(jnp.int32) + _ACT_VOCAB + _DIST_VOCAB],
        axis=0)                                       # (3, N)

    # Token tiling: TN multiple of 128; pad N up to a multiple of TN.
    n_aligned = ((N + 127) // 128) * 128
    tn = min(((tile_tokens + 127) // 128) * 128, n_aligned)
    n_pad = pl.cdiv(n_aligned, tn) * tn
    ids = jnp.pad(ids, ((0, 0), (0, n_pad - N)))      # padded tokens -> index 0 (discarded)

    gamma = ln_gamma.reshape(H, 1).astype(jnp.float32)
    beta = ln_beta.reshape(H, 1).astype(jnp.float32)

    cost = pl.CostEstimate(
        flops=2 * n_pad * _FUSED_VOCAB * H + 8 * n_pad * H,
        transcendentals=n_pad,
        bytes_accessed=n_pad * (3 * 4 + H * 4) + _FUSED_VOCAB * H * 4)

    out = pl.pallas_call(
        functools.partial(_actseq_embedding_kernel, eps),
        out_shape=jax.ShapeDtypeStruct((H, n_pad), jnp.float32),
        grid_spec=pltpu.PrefetchScalarGridSpec(
            num_scalar_prefetch=0,
            grid=(n_pad // tn,),
            in_specs=[
                pl.BlockSpec((3, tn), lambda i: (0, i)),             # packed indices tile
                pl.BlockSpec((H, _FUSED_VOCAB), lambda i: (0, 0)),   # fused table (resident)
                pl.BlockSpec((H, 1), lambda i: (0, 0)),              # LN gamma
                pl.BlockSpec((H, 1), lambda i: (0, 0)),              # LN beta
            ],
            out_specs=pl.BlockSpec((H, tn), lambda i: (0, i)),
        ),
        compiler_params=pltpu.CompilerParams(
            dimension_semantics=("parallel",)),
        cost_estimate=cost,
    )(ids, fused_t, gamma, beta)

    # Dropout: identity in eval-mode forward.
    return out[:, :N].T.reshape(B, S, H)


def _reference(act_seq, act_dist, act_step,
               act_table, dist_table, step_table,
               ln_gamma, ln_beta, eps=1e-12):
    emb = (act_table[act_seq] + dist_table[act_dist] + step_table[act_step])
    mean = jnp.mean(emb, axis=-1, keepdims=True)
    var = jnp.mean((emb - mean) ** 2, axis=-1, keepdims=True)
    norm = (emb - mean) / jnp.sqrt(var + eps)
    return norm * ln_gamma + ln_beta


if __name__ == "__main__":
    # Config: hidden_size=32, layer_norm_eps=1e-12, dropout prob irrelevant (eval).
    B, S, H = 2, 8, 32
    eps = 1e-12

    key = jax.random.PRNGKey(0)
    k0, k1, k2, k3, k4, k5 = jax.random.split(key, 6)

    # Deterministic parameter init (nn.Embedding ~ N(0,1); LayerNorm: w=1, b=0).
    act_table = jax.random.normal(k0, (7, H), dtype=jnp.float32)
    dist_table = jax.random.normal(k1, (41, H), dtype=jnp.float32)
    step_table = jax.random.normal(k2, (15, H), dtype=jnp.float32)
    ln_gamma = jnp.ones((H,), dtype=jnp.float32)
    ln_beta = jnp.zeros((H,), dtype=jnp.float32)

    # Example integer inputs.
    act_seq = jax.random.randint(k3, (B, S), 0, 7, dtype=jnp.int32)
    act_dist = jax.random.randint(k4, (B, S), 0, 41, dtype=jnp.int32)
    act_step = jax.random.randint(k5, (B, S), 0, 15, dtype=jnp.int32)

    out = actseq_embedding(act_seq, act_dist, act_step,
                           act_table, dist_table, step_table,
                           ln_gamma, ln_beta, eps=eps)
    out = jax.block_until_ready(out)

    ref = _reference(act_seq, act_dist, act_step,
                     act_table, dist_table, step_table,
                     ln_gamma, ln_beta, eps=eps)
    assert out.shape == (B, S, H)
    assert jnp.allclose(out, ref, atol=1e-5, rtol=1e-5), "mismatch vs reference"

    print("KERNEL_OK")
</pallas_src>

<mosaic_0001>
module attributes {stable_mosaic.version = 11 : i64} {
  func.func @_actseq_embedding_kernel(%arg0: i32, %arg1: memref<3x128xi32, #tpu.memory_space<vmem>>, %arg2: memref<32x64xf32, #tpu.memory_space<vmem>>, %arg3: memref<32x1xf32, #tpu.memory_space<vmem>>, %arg4: memref<32x1xf32, #tpu.memory_space<vmem>>, %arg5: memref<32x128xf32, #tpu.memory_space<vmem>>) attributes {dimension_semantics = [#tpu.dimension_semantics<parallel>], iteration_bounds = array<i64: 1>, scalar_prefetch = 0 : i64, scratch_operands = 0 : i64, tpu.core_type = #tpu.core_type<tc>, window_params = [{transform_indices = @transform_0, window_bounds = array<i64: 3, 128>}, {pipeline_mode = #tpu.pipeline_mode<synchronous>, transform_indices = @transform_1, window_bounds = array<i64: 32, 64>}, {pipeline_mode = #tpu.pipeline_mode<synchronous>, transform_indices = @transform_2, window_bounds = array<i64: 32, 1>}, {pipeline_mode = #tpu.pipeline_mode<synchronous>, transform_indices = @transform_3, window_bounds = array<i64: 32, 1>}, {transform_indices = @transform_4, window_bounds = array<i64: 32, 128>}]} {
    %c0 = arith.constant 0 : index
    %c0_0 = arith.constant 0 : index
    %0 = vector.load %arg1[%c0, %c0_0] : memref<3x128xi32, #tpu.memory_space<vmem>>, vector<3x128xi32>
    %1 = tpu.iota {dimensions = array<i32: 0>} : vector<64x128xi32>
    %2 = vector.extract_strided_slice %0 {offsets = [0, 0], sizes = [1, 128], strides = [1, 1]} : vector<3x128xi32> to vector<1x128xi32>
    %3 = vector.broadcast %2 : vector<1x128xi32> to vector<64x128xi32>
    %4 = arith.cmpi eq, %1, %3 : vector<64x128xi32>
    %5 = vector.extract_strided_slice %0 {offsets = [1, 0], sizes = [1, 128], strides = [1, 1]} : vector<3x128xi32> to vector<1x128xi32>
    %6 = vector.broadcast %5 : vector<1x128xi32> to vector<64x128xi32>
    %7 = arith.cmpi eq, %1, %6 : vector<64x128xi32>
    %8 = arith.ori %4, %7 : vector<64x128xi1>
    %9 = vector.extract_strided_slice %0 {offsets = [2, 0], sizes = [1, 128], strides = [1, 1]} : vector<3x128xi32> to vector<1x128xi32>
    %10 = vector.broadcast %9 : vector<1x128xi32> to vector<64x128xi32>
    %11 = arith.cmpi eq, %1, %10 : vector<64x128xi32>
    %12 = arith.ori %8, %11 : vector<64x128xi1>
    %13 = arith.extui %12 : vector<64x128xi1> to vector<64x128xi32>
    %14 = arith.sitofp %13 : vector<64x128xi32> to vector<64x128xf32>
    %c0_1 = arith.constant 0 : index
    %c0_2 = arith.constant 0 : index
    %15 = vector.load %arg2[%c0_1, %c0_2] : memref<32x64xf32, #tpu.memory_space<vmem>>, vector<32x64xf32>
    %cst = arith.constant dense<0.000000e+00> : vector<32x128xf32>
    %16 = tpu.matmul %15, %14, %cst {dimension_numbers = #tpu.dot_dimension_numbers<[1], [0], [0], [1], [0, 0, 1, 1], [], []>} : vector<32x64xf32>, vector<64x128xf32>, vector<32x128xf32> -> vector<32x128xf32>
    %cst_3 = arith.constant dense<0.000000e+00> : vector<128xf32>
    %17 = vector.multi_reduction <add>, %16, %cst_3 [0] : vector<32x128xf32> to vector<128xf32>
    %18 = vector.shape_cast %17 : vector<128xf32> to vector<1x128xf32>
    %cst_4 = arith.constant 3.200000e+01 : f32
    %19 = vector.broadcast %cst_4 : f32 to vector<1x128xf32>
    %20 = arith.divf %18, %19 : vector<1x128xf32>
    %21 = vector.broadcast %20 : vector<1x128xf32> to vector<32x128xf32>
    %22 = arith.subf %16, %21 : vector<32x128xf32>
    %23 = arith.mulf %22, %22 : vector<32x128xf32>
    %cst_5 = arith.constant dense<0.000000e+00> : vector<128xf32>
    %24 = vector.multi_reduction <add>, %23, %cst_5 [0] : vector<32x128xf32> to vector<128xf32>
    %25 = vector.shape_cast %24 : vector<128xf32> to vector<1x128xf32>
    %cst_6 = arith.constant 3.200000e+01 : f32
    %26 = vector.broadcast %cst_6 : f32 to vector<1x128xf32>
    %27 = arith.divf %25, %26 : vector<1x128xf32>
    %cst_7 = arith.constant 9.99999996E-13 : f32
    %28 = vector.broadcast %cst_7 : f32 to vector<1x128xf32>
    %29 = arith.addf %27, %28 : vector<1x128xf32>
    %30 = math.rsqrt %29 : vector<1x128xf32>
    %31 = vector.broadcast %30 : vector<1x128xf32> to vector<32x128xf32>
    %32 = arith.mulf %22, %31 : vector<32x128xf32>
    %c0_8 = arith.constant 0 : index
    %c0_9 = arith.constant 0 : index
    %33 = vector.load %arg3[%c0_8, %c0_9] : memref<32x1xf32, #tpu.memory_space<vmem>>, vector<32x1xf32>
    %34 = vector.broadcast %33 : vector<32x1xf32> to vector<32x128xf32>
    %35 = arith.mulf %32, %34 : vector<32x128xf32>
    %c0_10 = arith.constant 0 : index
    %c0_11 = arith.constant 0 : index
    %36 = vector.load %arg4[%c0_10, %c0_11] : memref<32x1xf32, #tpu.memory_space<vmem>>, vector<32x1xf32>
    %37 = vector.broadcast %36 : vector<32x1xf32> to vector<32x128xf32>
    %38 = arith.addf %35, %37 : vector<32x128xf32>
    %c0_12 = arith.constant 0 : index
    %c0_13 = arith.constant 0 : index
    %39 = vector.load %arg5[%c0_12, %c0_13] : memref<32x128xf32, #tpu.memory_space<vmem>>, vector<32x128xf32>
    tpu.vector_store %arg5[%c0_12, %c0_13], %38 {strides = array<i32>} : memref<32x128xf32, #tpu.memory_space<vmem>>, vector<32x128xf32>,
    return
  }
  func.func @transform_0(%arg0: i32) -> (i32, i32) {
    %c0_i32 = arith.constant 0 : i32
    %c0_i32_0 = arith.constant 0 : i32
    return %c0_i32, %arg0 : i32, i32
  }
  func.func @transform_1(%arg0: i32) -> (i32, i32) {
    %c0_i32 = arith.constant 0 : i32
    %c0_i32_0 = arith.constant 0 : i32
    %c0_i32_1 = arith.constant 0 : i32
    return %c0_i32, %c0_i32_0 : i32, i32
  }
  func.func @transform_2(%arg0: i32) -> (i32, i32) {
    %c0_i32 = arith.constant 0 : i32
    %c0_i32_0 = arith.constant 0 : i32
    %c0_i32_1 = arith.constant 0 : i32
    return %c0_i32, %c0_i32_0 : i32, i32
  }
  func.func @transform_3(%arg0: i32) -> (i32, i32) {
    %c0_i32 = arith.constant 0 : i32
    %c0_i32_0 = arith.constant 0 : i32
    %c0_i32_1 = arith.constant 0 : i32
    return %c0_i32, %c0_i32_0 : i32, i32
  }
  func.func @transform_4(%arg0: i32) -> (i32, i32) {
    %c0_i32 = arith.constant 0 : i32
    %c0_i32_0 = arith.constant 0 : i32
    return %c0_i32, %arg0 : i32, i32
  }
}

</mosaic_0001>

<llo_original>
// kernel: tpu_custom_call.1
$region0: #{tpu_custom_call.1}
  #allocation0 [shape = 'u32[]', space=smem, size = 0x4, offset = 0x4, fixed_abs, tag = 'smem constant byte address 0x4 - core index']
  #allocation1 [shape = 'u32[144,128]{1,0:T(1,128)}', space=vmem, size = 0x12000, scoped, tag = 'internal scratch']
  %s0 = inlined_call_operand.vmem [shape: s32[3,128], index: 0, kind: input, shape index: {}]
  %s1 = inlined_call_operand.vmem [shape: f32[32,64], index: 1, kind: input, shape index: {}]
  %s2 = inlined_call_operand.vmem [shape: f32[32,1], index: 2, kind: input, shape index: {}]
  %s3 = inlined_call_operand.vmem [shape: f32[32,1], index: 3, kind: input, shape index: {}]
  %s4 = inlined_call_operand.hbm [shape: f32[32,128], index: 4, kind: output, shape index: {}]
  %s5 = sld [smem:[#allocation0]]
  $region26: #{tpu_custom_call.1} parent=0
    _
  %s7 = ssub.s32 1, %s5
  %s8 = scalar_select 0, %s7, %s5
  $region1: #{tpu_custom_call.1} parent=0
    #allocation2 [shape = 'u8[16384]{0}', space=vmem, size = 0x4000, scoped, tag = 'output window, operand 0, single buffered']
    #allocation3 [shape = 's32[1]{0}', space=sflag, size = 0x4, scoped, tag = 'scoped memory for tpu_custom_call.1']
    %9 = vsyncpa [#allocation3], 0
    // Predicated region
    $region2: #{tpu_custom_call.1} parent=1 // pred_check
      _
    $region3: #{tpu_custom_call.1} parent=1 // pred_check_branch
      %11 = sbr.rel (0) target = $region5
    $region4: #{tpu_custom_call.1} parent=1 // pred_region
      _
    $region5: #{tpu_custom_call.1} parent=1 // pred_fallthru
      _
    // Predicated region
    $region6: #{tpu_custom_call.1} parent=1 // pred_check
      _
    $region7: #{tpu_custom_call.1} parent=1 // pred_check_branch
      %13 = sbr.rel (0) target = $region9
    $region8: #{tpu_custom_call.1} parent=1 // pred_region
      _
    $region9: #{tpu_custom_call.1} parent=1 // pred_fallthru
      _
    // Predicated region
    $region10: #{tpu_custom_call.1} parent=1 // pred_check
      _
    $region11: #{tpu_custom_call.1} parent=1 // pred_check_branch
      %15 = sbr.rel (0) target = $region13
    $region12: #{tpu_custom_call.1} parent=1 // pred_region
      _
    $region13: #{tpu_custom_call.1} parent=1 // pred_fallthru
      _
    // Predicated region
    $region14: #{tpu_custom_call.1} parent=1 // pred_check
      _
    $region15: #{tpu_custom_call.1} parent=1 // pred_check_branch
      %17 = sbr.rel (0) target = $region17
    $region16: #{tpu_custom_call.1} parent=1 // pred_region
      _
    $region17: #{tpu_custom_call.1} parent=1 // pred_fallthru
      _
    %v18 = vld [vmem:[%s0] sm:$0x7]
    %v19 = vlaneseq
    %v20 = vshrl.u32 %v19, 7
    %v21 = vadd.s32 %v20, 8
    %v22 = vadd.s32 %v20, 16
    %v23 = vadd.s32 %v20, 24
    %v24 = vadd.s32 %v20, 32
    %v25 = vadd.s32 %v20, 40
    %v26 = vadd.s32 %v20, 48
    %v27 = vadd.s32 %v20, 56
    %v28 = vlaneseq
    %v29 = vshrl.u32 %v28, 7
    %v30 = vsub.s32 0, %v29
    %v31 = vrot.slane %v18, %v30
    %vm32 = vcmp.eq.s32.totalorder %v20, %v31
    %vm33 = vcmp.eq.s32.totalorder %v21, %v31
    %vm34 = vcmp.eq.s32.totalorder %v22, %v31
    %vm35 = vcmp.eq.s32.totalorder %v23, %v31
    %vm36 = vcmp.eq.s32.totalorder %v24, %v31
    %vm37 = vcmp.eq.s32.totalorder %v25, %v31
    %vm38 = vcmp.eq.s32.totalorder %v26, %v31
    %vm39 = vcmp.eq.s32.totalorder %v27, %v31
    %v40 = vlaneseq
    %v41 = vshrl.u32 %v40, 7
    %v42 = vsub.s32 1, %v41
    %v43 = vrot.slane %v18, %v42
    %vm44 = vcmp.eq.s32.totalorder %v20, %v43
    %vm45 = vcmp.eq.s32.totalorder %v21, %v43
    %vm46 = vcmp.eq.s32.totalorder %v22, %v43
    %vm47 = vcmp.eq.s32.totalorder %v23, %v43
    %vm48 = vcmp.eq.s32.totalorder %v24, %v43
    %vm49 = vcmp.eq.s32.totalorder %v25, %v43
    %vm50 = vcmp.eq.s32.totalorder %v26, %v43
    %vm51 = vcmp.eq.s32.totalorder %v27, %v43
    %vm52 = vmor %vm32, %vm44
    %vm53 = vmor %vm33, %vm45
    %vm54 = vmor %vm34, %vm46
    %vm55 = vmor %vm35, %vm47
    %vm56 = vmor %vm36, %vm48
    %vm57 = vmor %vm37, %vm49
    %vm58 = vmor %vm38, %vm50
    %vm59 = vmor %vm39, %vm51
    %v60 = vlaneseq
    %v61 = vshrl.u32 %v60, 7
    %v62 = vsub.s32 2, %v61
    %v63 = vrot.slane %v18, %v62
    %vm64 = vcmp.eq.s32.totalorder %v20, %v63
    %vm65 = vcmp.eq.s32.totalorder %v21, %v63
    %vm66 = vcmp.eq.s32.totalorder %v22, %v63
    %vm67 = vcmp.eq.s32.totalorder %v23, %v63
    %vm68 = vcmp.eq.s32.totalorder %v24, %v63
    %vm69 = vcmp.eq.s32.totalorder %v25, %v63
    %vm70 = vcmp.eq.s32.totalorder %v26, %v63
    %vm71 = vcmp.eq.s32.totalorder %v27, %v63
    %vm72 = vmor %vm52, %vm64
    %vm73 = vmor %vm53, %vm65
    %vm74 = vmor %vm54, %vm66
    %vm75 = vmor %vm55, %vm67
    %vm76 = vmor %vm56, %vm68
    %vm77 = vmor %vm57, %vm69
    %vm78 = vmor %vm58, %vm70
    %vm79 = vmor %vm59, %vm71
    %v80 = vsel %vm72, 1, 0
    %v81 = vsel %vm73, 1, 0
    %v82 = vsel %vm74, 1, 0
    %v83 = vsel %vm75, 1, 0
    %v84 = vsel %vm76, 1, 0
    %v85 = vsel %vm77, 1, 0
    %v86 = vsel %vm78, 1, 0
    %v87 = vsel %vm79, 1, 0
    %v88 = vcvt.s32.f32 %v80
    %v89 = vcvt.s32.f32 %v81
    %v90 = vcvt.s32.f32 %v82
    %v91 = vcvt.s32.f32 %v83
    %v92 = vcvt.s32.f32 %v84
    %v93 = vcvt.s32.f32 %v85
    %v94 = vcvt.s32.f32 %v86
    %v95 = vcvt.s32.f32 %v87
    %v96 = vld [vmem:[%s1] sm:$0xff]
    %v97 = vld [vmem:[%s1 + $0x8] sm:$0xff]
    %v98 = vld [vmem:[%s1 + $0x10] sm:$0xff]
    %v99 = vld [vmem:[%s1 + $0x18] sm:$0xff]
    %vm100 = vcmask 523264
    %v102 = vsel %vm100, %v96, 0
    %v105 = vsel %vm100, %v97, 0
    %v108 = vsel %vm100, %v98, 0
    %v111 = vsel %vm100, %v99, 0
    %113 = vmatprep.subr.mxu0 0.0
    %114 = vmatpush1.msra.mxu0 %v88
    %115 = vmatprep.subr.mxu0 0.0
    %116 = vmatpush1.msra.mxu0 %v89
    %117 = vmatprep.subr.mxu0 0.0
    %118 = vmatpush1.msra.mxu0 %v90
    %119 = vmatprep.subr.mxu0 0.0
    %120 = vmatpush1.msra.mxu0 %v91
    %121 = vmatprep.subr.mxu0 0.0
    %122 = vmatpush1.msra.mxu0 %v92
    %123 = vmatprep.subr.mxu0 0.0
    %124 = vmatpush1.msra.mxu0 %v93
    %125 = vmatprep.subr.mxu0 0.0
    %126 = vmatpush1.msra.mxu0 %v94
    %127 = vmatprep.subr.mxu0 0.0
    %128 = vmatpush1.msra.mxu0 %v95
    %129 = vmatprep.subr.mxu0 0.0
    %130 = vmatpush1.msra.mxu0 0.0
    %131 = vmatprep.subr.mxu0 0.0
    %132 = vmatpush1.msra.mxu0 0.0
    %133 = vmatprep.subr.mxu0 0.0
    %134 = vmatpush1.msra.mxu0 0.0
    %135 = vmatprep.subr.mxu0 0.0
    %136 = vmatpush1.msra.mxu0 0.0
    %137 = vmatprep.subr.mxu0 0.0
    %138 = vmatpush1.msra.mxu0 0.0
    %139 = vmatprep.subr.mxu0 0.0
    %140 = vmatpush1.msra.mxu0 0.0
    %141 = vmatprep.subr.mxu0 0.0
    %142 = vmatpush1.msra.mxu0 0.0
    %143 = vmatprep.subr.mxu0 0.0
    %144 = vmatpush1.msra.mxu0 0.0
    %145 = vmatprep.subr.mxu0 0.0
    %146 = vmatpush1.msra.mxu0 0.0
    %147 = vmatprep.subr.mxu0 0.0
    %148 = vmatpush1.msra.mxu0 0.0
    %149 = vmatprep.subr.mxu0 0.0
    %150 = vmatpush1.msra.mxu0 0.0
    %151 = vmatprep.subr.mxu0 0.0
    %152 = vmatpush1.msra.mxu0 0.0
    %153 = vmatprep.subr.mxu0 0.0
    %154 = vmatpush1.msra.mxu0 0.0
    %155 = vmatprep.subr.mxu0 0.0
    %156 = vmatpush1.msra.mxu0 0.0
    %157 = vmatprep.subr.mxu0 0.0
    %158 = vmatpush1.msra.mxu0 0.0
    %159 = vmatprep.subr.mxu0 0.0
    %160 = vmatpush1.msra.mxu0 0.0
    %161 = vmatprep.subr.mxu0 0.0
    %162 = vmatpush1.msra.mxu0 0.0
    %163 = vmatprep.subr.mxu0 0.0
    %164 = vmatpush1.msra.mxu0 0.0
    %165 = vmatprep.subr.mxu0 0.0
    %166 = vmatpush1.msra.mxu0 0.0
    %167 = vmatprep.subr.mxu0 0.0
    %168 = vmatpush1.msra.mxu0 0.0
    %169 = vmatprep.subr.mxu0 0.0
    %170 = vmatpush1.msra.mxu0 0.0
    %171 = vmatprep.subr.mxu0 0.0
    %172 = vmatpush1.msra.mxu0 0.0
    %173 = vmatprep.subr.mxu0 0.0
    %174 = vmatpush1.msra.mxu0 0.0
    %175 = vmatprep.subr.mxu0 0.0
    %176 = vmatpush1.msra.mxu0 0.0
    %177 = vmatprep.mubr.f32.mxu0 0.0
    %178 = vmatmul.mubr.f32.gmra.mrb[0].mxu0 %v102
    %v179 = vpop.f32.mrb[0].mxu0
    %v180 = vadd.f32 0.0, %v179
    %v181 = vpop.f32.mrb[0].mxu0
    %182 = vmatprep.mubr.f32.mxu0 0.0
    %183 = vmatmul.mubr.f32.gmra.mrb[0].mxu0 %v105
    %v184 = vpop.f32.mrb[0].mxu0
    %v185 = vadd.f32 0.0, %v184
    %v186 = vpop.f32.mrb[0].mxu0
    %187 = vmatprep.mubr.f32.mxu0 0.0
    %188 = vmatmul.mubr.f32.gmra.mrb[0].mxu0 %v108
    %v189 = vpop.f32.mrb[0].mxu0
    %v190 = vadd.f32 0.0, %v189
    %v191 = vpop.f32.mrb[0].mxu0
    %192 = vmatprep.mubr.f32.mxu0 0.0
    %193 = vmatmul.mubr.f32.gmra.mrb[0].mxu0 %v111
    %v194 = vpop.f32.mrb[0].mxu0
    %v195 = vadd.f32 0.0, %v194
    %v196 = vpop.f32.mrb[0].mxu0
    %197 = vdwg.mxu0
    %v198 = vadd.f32 %v180, %v185
    %v199 = vadd.f32 %v198, %v190
    %v200 = vadd.f32 %v199, %v195
    %v201 = vrot.slane %v200, 4
    %v202 = vadd.f32 %v200, %v201
    %v203 = vrot.slane %v202, 2
    %v204 = vadd.f32 %v202, %v203
    %v205 = vrot.slane %v204, 1
    %v206 = vadd.f32 %v204, %v205
    %v207 = vrcp.pop 32.0
    %v208 = vmul.f32 %v206, %v207
    %v209 = vsub.f32 %v180, %v208
    %v210 = vsub.f32 %v185, %v208
    %v211 = vsub.f32 %v190, %v208
    %v212 = vsub.f32 %v195, %v208
    %v213 = vmul.f32 %v209, %v209
    %v214 = vmul.f32 %v210, %v210
    %v215 = vmul.f32 %v211, %v211
    %v216 = vmul.f32 %v212, %v212
    %v217 = vadd.f32 %v213, %v214
    %v218 = vadd.f32 %v217, %v215
    %v219 = vadd.f32 %v218, %v216
    %v220 = vrot.slane %v219, 4
    %v221 = vadd.f32 %v219, %v220
    %v222 = vrot.slane %v221, 2
    %v223 = vadd.f32 %v221, %v222
    %v224 = vrot.slane %v223, 1
    %v225 = vadd.f32 %v223, %v224
    %v226 = vmul.f32 %v225, %v207
    %v227 = vadd.f32 %v226, 1e-12
    %v228 = vrsqrt.pop %v227
    %v229 = vmul.f32 %v209, %v228
    %v230 = vmul.f32 %v210, %v228
    %v231 = vmul.f32 %v211, %v228
    %v232 = vmul.f32 %v212, %v228
    %v233 = vld [vmem:[%s2] sm:$0xff]
    %v234 = vld [vmem:[%s2 + $0x8] sm:$0xff]
    %v235 = vld [vmem:[%s2 + $0x10] sm:$0xff]
    %v236 = vld [vmem:[%s2 + $0x18] sm:$0xff]
    %238 = vset.pattern.permute.xlu0 0
    %239 = vperm.xlu0 %238, %v233
    %v240 = vpop.permute.xlu0 %239
    %243 = vset.pattern.permute.xlu0 0
    %244 = vperm.xlu0 %243, %v234
    %v245 = vpop.permute.xlu0 %244
    %248 = vset.pattern.permute.xlu0 0
    %249 = vperm.xlu0 %248, %v235
    %v250 = vpop.permute.xlu0 %249
    %253 = vset.pattern.permute.xlu0 0
    %254 = vperm.xlu0 %253, %v236
    %v255 = vpop.permute.xlu0 %254
    %v257 = vmul.f32 %v229, %v240
    %v258 = vmul.f32 %v230, %v245
    %v259 = vmul.f32 %v231, %v250
    %v260 = vmul.f32 %v232, %v255
    %v261 = vld [vmem:[%s3] sm:$0xff]
    %v262 = vld [vmem:[%s3 + $0x8] sm:$0xff]
    %v263 = vld [vmem:[%s3 + $0x10] sm:$0xff]
    %v264 = vld [vmem:[%s3 + $0x18] sm:$0xff]
    %266 = vset.pattern.permute.xlu0 0
    %267 = vperm.xlu0 %266, %v261
    %v268 = vpop.permute.xlu0 %267
    %271 = vset.pattern.permute.xlu0 0
    %272 = vperm.xlu0 %271, %v262
    %v273 = vpop.permute.xlu0 %272
    %276 = vset.pattern.permute.xlu0 0
    %277 = vperm.xlu0 %276, %v263
    %v278 = vpop.permute.xlu0 %277
    %281 = vset.pattern.permute.xlu0 0
    %282 = vperm.xlu0 %281, %v264
    %v283 = vpop.permute.xlu0 %282
    %v285 = vadd.f32 %v257, %v268
    %v286 = vadd.f32 %v258, %v273
    %v287 = vadd.f32 %v259, %v278
    %v288 = vadd.f32 %v260, %v283
    %289 = vst [vmem:[#allocation2] sm:$0xff] %v285
    %290 = vst [vmem:[#allocation2 + $0x8] sm:$0xff] %v286
    %291 = vst [vmem:[#allocation2 + $0x10] sm:$0xff] %v287
    %292 = vst [vmem:[#allocation2 + $0x18] sm:$0xff] %v288
    // Predicated region
    $region18: #{tpu_custom_call.1} parent=1 // pred_check
      _
    $region19: #{tpu_custom_call.1} parent=1 // pred_check_branch
      %294 = sbr.rel (0) target = $region21
    $region20: #{tpu_custom_call.1} parent=1 // pred_region
      %s296 = ssub.s32 512, 512
      %297 = vsyncadd [#allocation3], %s296
      %s298 = sshll.u32 [#allocation2], 4
      %s299 = int_to_ptr.vmem [resolvable:$true] %s298
      %304 = dma.vmem_to_hbm [thread:$0]  %s299, 512, %s4, [#allocation3], 128, 128, 8
    $region21: #{tpu_custom_call.1} parent=1 // pred_fallthru
      _
    // Predicated region
    $region22: #{tpu_custom_call.1} parent=1 // pred_check
      _
    $region23: #{tpu_custom_call.1} parent=1 // pred_check_branch
      %306 = sbr.rel (0) target = $region25
    $region24: #{tpu_custom_call.1} parent=1 // pred_region
      %307 = dma.done [#allocation3], 512
    $region25: #{tpu_custom_call.1} parent=1 // pred_fallthru
      _
    %308 = vsyncpa [#allocation3], 1

</llo_original>
